<compile_context>
chip_gen: v6e
topology: v6e:2x2x1
jax: 0.10.0
libtpu: 0.0.40
codegen_flags: <defaults>
</compile_context>

<pallas_src>
import functools

import numpy as np
import jax
import jax.numpy as jnp
from jax import lax
from jax.experimental import pallas as pl
from jax.experimental.pallas import tpu as pltpu


def _round_up(x, m):
    return ((x + m - 1) // m) * m


def _cluster_cons_kernel(scale_ref, w_ref, y_ref, loss_ref, acc_ref, *, num_classes):
    """One step of the cell-axis reduction plus the O(N^2) finalize.

    scale_ref: (N, 1)      f32  VMEM  per-row 1/n_take
    w_ref:     (N, TILE_C) bf16 VMEM  0/1 membership mask tile
    y_ref:     (TILE_C, D) f32  VMEM  embedding tile
    loss_ref:  (1, 1)      f32  SMEM  scalar loss output
    acc_ref:   (N, D)      f32  VMEM  scratch: running sum of selected rows
    """
    k = pl.program_id(0)

    @pl.when(k == 0)
    def _():
        acc_ref[...] = jnp.zeros_like(acc_ref)

    # Stream the cells: accumulate per-class subset sums on the MXU.
    acc_ref[...] += jnp.dot(w_ref[...].astype(jnp.float32), y_ref[...],
                            preferred_element_type=jnp.float32)

    @pl.when(k == pl.num_programs(0) - 1)
    def _():
        K = num_classes
        N = acc_ref.shape[0]

        # Subset means: fold the 1/n_take scale once (exact).
        c = acc_ref[...] * scale_ref[...]                                 # (N, D)

        # Cosine pre-normalization: lane reduce + EUP rsqrt.
        # 1 / max(||c_i||, 1e-8) == rsqrt(max(||c_i||^2, 1e-16))
        norm_sq = jnp.sum(c * c, axis=-1, keepdims=True)                  # (N, 1)
        c_n = c * lax.rsqrt(jnp.maximum(norm_sq, jnp.float32(1e-16)))     # (N, D)

        # Full cosine-similarity matrix on the MXU.
        sim = lax.dot_general(c_n, c_n, (((1,), (1,)), ((), ())),
                              preferred_element_type=jnp.float32)         # (N, N)

        # CrossEntropyLoss(reduction='sum') with target 0: the logits row is
        # {positive} U negatives == all off-diagonal sims of row i (the
        # positive equals the masked +-K entry by symmetry).  |sim| <= 1 so
        # no max shift; subtract exp(diag) recomputed from c_n (matches
        # sim[i,i] even for clamped zero-norm centers) instead of an (N,N)
        # iota/where mask.
        diag = jnp.sum(c_n * c_n, axis=-1, keepdims=True)                 # (N, 1)
        exp_sum = jnp.sum(jnp.exp(sim), axis=-1, keepdims=True) - jnp.exp(diag)
        sum_lse = jnp.sum(jnp.log(exp_sum))

        # Positives: pos_i = <c_n[i], c_n[(i+K) mod N]>.  Pair rows with an
        # XLU sublane rotation (free slot, no misaligned half-slices).
        sum_pos = jnp.sum(c_n * pltpu.roll(c_n, shift=K, axis=0))

        # Reference does CE(sum) then divides by N.
        loss_ref[0, 0] = (sum_lse - sum_pos) / jnp.float32(N)


def cluster_cons_loss_pallas(w_mask, scale, y, num_classes, *, tile_c=1024):
    """w_mask: (N, C) 0/1 membership mask, scale: (N, 1) f32 = 1/n_take,
    y: (C, D) f32 embeddings.  Returns the scalar loss."""
    w_mask = jnp.asarray(w_mask, jnp.bfloat16)   # 0/1 exact in bf16, half the HBM bytes
    scale = jnp.asarray(scale, jnp.float32)
    y = jnp.asarray(y, jnp.float32)

    N, C = w_mask.shape
    D = y.shape[1]

    # Tile the cell axis (multiple of 128 for lane/sublane alignment); zero-pad
    # the ragged tail so padded rows contribute exactly zero to the accumulator.
    tile_c = min(int(tile_c), _round_up(C, 128))
    c_pad = _round_up(C, tile_c)
    if c_pad != C:
        w_mask = jnp.pad(w_mask, ((0, 0), (0, c_pad - C)))
        y = jnp.pad(y, ((0, c_pad - C), (0, 0)))
    grid = (c_pad // tile_c,)

    cost = pl.CostEstimate(
        flops=2 * N * c_pad * D + 2 * N * N * D,
        transcendentals=N * N + 3 * N,
        bytes_accessed=N * c_pad * 2 + c_pad * D * 4 + N * 4 + N * D * 4 + 4,
    )

    out = pl.pallas_call(
        functools.partial(_cluster_cons_kernel, num_classes=num_classes),
        out_shape=jax.ShapeDtypeStruct((1, 1), jnp.float32),
        grid=grid,
        in_specs=[
            pl.BlockSpec((N, 1), lambda k: (0, 0)),           # scale (resident)
            pl.BlockSpec((N, tile_c), lambda k: (0, k)),      # W mask tile
            pl.BlockSpec((tile_c, D), lambda k: (k, 0)),      # y tile
        ],
        out_specs=pl.BlockSpec((1, 1), lambda k: (0, 0),
                               memory_space=pltpu.MemorySpace.SMEM),
        scratch_shapes=[pltpu.VMEM((N, D), jnp.float32)],
        compiler_params=pltpu.CompilerParams(
            dimension_semantics=("arbitrary",)),
        cost_estimate=cost,
    )(scale, w_mask, y)
    return out[0, 0]


def build_membership(label, rate, np_rng):
    """Host-side glue (indices only): 0/1 subset-mask + per-row 1/n_take scale.

    Row lid (resp. K+lid) marks the positions of the first (resp. second)
    random subset of class lid, so (W @ y) * scale reproduces the torch
    per-class randperm subset means on device.
    """
    label = np.asarray(label)
    num_classes = int(len(np.unique(label)))
    num_cells = label.shape[0]
    mask = np.zeros((2 * num_classes, num_cells), dtype=np.float32)
    scale = np.zeros((2 * num_classes, 1), dtype=np.float32)
    for lid in range(num_classes):
        idx = np.where(label == lid)[0]
        l_nums = idx.shape[0]
        n_take = max(1, int(l_nums * rate))   # guard: never 0 (no inf/NaN weights)
        sel1 = idx[np_rng.permutation(l_nums)[:n_take]]
        sel2 = idx[np_rng.permutation(l_nums)[:n_take]]
        mask[lid, sel1] = 1.0
        mask[num_classes + lid, sel2] = 1.0
        scale[lid, 0] = 1.0 / n_take
        scale[num_classes + lid, 0] = 1.0 / n_take
    return mask, scale, num_classes


def cluster_cons_loss(y, label, rate=0.3, np_rng=None):
    if np_rng is None:
        np_rng = np.random.RandomState(0)
    mask, scale, num_classes = build_membership(label, rate, np_rng)
    return cluster_cons_loss_pallas(mask, scale, y, num_classes)


def _reference_loss(w_mask, scale, y, num_classes):
    """Numpy mirror of the torch forward (given the same sampled subsets)."""
    c = (w_mask.astype(np.float64) @ np.asarray(y, dtype=np.float64)) * scale.astype(np.float64)
    K = num_classes
    N = 2 * K
    norms = np.maximum(np.linalg.norm(c, axis=1, keepdims=True), 1e-8)
    cn = c / norms
    sim = cn @ cn.T
    pos_diag = np.diag(sim, K)                                   # length K
    pos = np.concatenate([pos_diag, pos_diag])[:, None]          # (N, 1)
    mask = np.ones((N, N), dtype=bool)
    np.fill_diagonal(mask, False)
    for i in range(K):
        mask[i, K + i] = False
        mask[K + i, i] = False
    neg = sim[mask].reshape(N, -1)
    logits = np.concatenate([pos, neg], axis=1)
    lse = np.log(np.sum(np.exp(logits), axis=1))
    return float(np.sum(lse - logits[:, 0]) / N)


if __name__ == "__main__":
    key = jax.random.PRNGKey(0)

    num_classes = 4
    cells_per_class = 10
    feat_dim = 32

    # Deterministic synthetic embeddings and labels.
    label = np.repeat(np.arange(num_classes), cells_per_class)   # (40,)
    y = jax.random.normal(key, (num_classes * cells_per_class, feat_dim),
                          dtype=jnp.float32)

    np_rng = np.random.RandomState(0)
    w_mask, scale, k = build_membership(label, rate=0.3, np_rng=np_rng)

    loss = cluster_cons_loss_pallas(w_mask, scale, y, k)
    loss = jax.block_until_ready(loss)

    ref = _reference_loss(w_mask, scale, np.asarray(y), k)
    assert np.isfinite(float(loss))
    assert abs(float(loss) - ref) < 1e-3, (float(loss), ref)
    print("KERNEL_OK")
</pallas_src>

<mosaic_0001>
module attributes {stable_mosaic.version = 11 : i64} {
  func.func @_cluster_cons_kernel(%arg0: i32, %arg1: memref<8x1xf32, #tpu.memory_space<vmem>>, %arg2: memref<8x128xbf16, #tpu.memory_space<vmem>>, %arg3: memref<128x32xf32, #tpu.memory_space<vmem>>, %arg4: memref<1x1xf32, #tpu.memory_space<smem>>, %arg5: memref<8x32xf32, #tpu.memory_space<vmem>>) attributes {dimension_semantics = [#tpu.dimension_semantics<arbitrary>], iteration_bounds = array<i64: 1>, scalar_prefetch = 0 : i64, scratch_operands = 1 : i64, tpu.core_type = #tpu.core_type<tc>, window_params = [{pipeline_mode = #tpu.pipeline_mode<synchronous>, transform_indices = @transform_0, window_bounds = array<i64: 8, 1>}, {transform_indices = @transform_1, window_bounds = array<i64: 8, 128>}, {transform_indices = @transform_2, window_bounds = array<i64: 128, 32>}, {transform_indices = @transform_3, window_bounds = array<i64: 1, 1>}]} {
    %c0_i32 = arith.constant 0 : i32
    %0 = arith.cmpi eq, %arg0, %c0_i32 : i32
    %1 = arith.extui %0 : i1 to i32
    %c0_i32_0 = arith.constant 0 : i32
    %2 = arith.cmpi ne, %1, %c0_i32_0 : i32
    scf.if %2 {
      %cst_10 = arith.constant 0.000000e+00 : f32
      %13 = vector.broadcast %cst_10 : f32 to vector<8x32xf32>
      %c0_11 = arith.constant 0 : index
      %c0_12 = arith.constant 0 : index
      %14 = vector.load %arg5[%c0_11, %c0_12] : memref<8x32xf32, #tpu.memory_space<vmem>>, vector<8x32xf32>
      tpu.vector_store %arg5[%c0_11, %c0_12], %13 {strides = array<i32>} : memref<8x32xf32, #tpu.memory_space<vmem>>, vector<8x32xf32>,
    } else {
    }
    %c0 = arith.constant 0 : index
    %c0_1 = arith.constant 0 : index
    %3 = vector.load %arg5[%c0, %c0_1] : memref<8x32xf32, #tpu.memory_space<vmem>>, vector<8x32xf32>
    %c0_2 = arith.constant 0 : index
    %c0_3 = arith.constant 0 : index
    %4 = vector.load %arg2[%c0_2, %c0_3] : memref<8x128xbf16, #tpu.memory_space<vmem>>, vector<8x128xbf16>
    %5 = arith.extf %4 : vector<8x128xbf16> to vector<8x128xf32>
    %c0_4 = arith.constant 0 : index
    %c0_5 = arith.constant 0 : index
    %6 = vector.load %arg3[%c0_4, %c0_5] : memref<128x32xf32, #tpu.memory_space<vmem>>, vector<128x32xf32>
    %cst = arith.constant dense<0.000000e+00> : vector<8x32xf32>
    %7 = tpu.matmul %5, %6, %cst {dimension_numbers = #tpu.dot_dimension_numbers<[1], [0], [0], [1], [0, 0, 1, 1], [], []>} : vector<8x128xf32>, vector<128x32xf32>, vector<8x32xf32> -> vector<8x32xf32>
    %8 = arith.addf %3, %7 : vector<8x32xf32>
    %c0_6 = arith.constant 0 : index
    %c0_7 = arith.constant 0 : index
    %9 = vector.load %arg5[%c0_6, %c0_7] : memref<8x32xf32, #tpu.memory_space<vmem>>, vector<8x32xf32>
    tpu.vector_store %arg5[%c0_6, %c0_7], %8 {strides = array<i32>} : memref<8x32xf32, #tpu.memory_space<vmem>>, vector<8x32xf32>,
    %c0_i32_8 = arith.constant 0 : i32
    %10 = arith.cmpi eq, %arg0, %c0_i32_8 : i32
    %11 = arith.extui %10 : i1 to i32
    %c0_i32_9 = arith.constant 0 : i32
    %12 = arith.cmpi ne, %11, %c0_i32_9 : i32
    scf.if %12 {
      %c0_10 = arith.constant 0 : index
      %c0_11 = arith.constant 0 : index
      %13 = vector.load %arg5[%c0_10, %c0_11] : memref<8x32xf32, #tpu.memory_space<vmem>>, vector<8x32xf32>
      %c0_12 = arith.constant 0 : index
      %c0_13 = arith.constant 0 : index
      %14 = vector.load %arg1[%c0_12, %c0_13] : memref<8x1xf32, #tpu.memory_space<vmem>>, vector<8x1xf32>
      %15 = vector.broadcast %14 : vector<8x1xf32> to vector<8x32xf32>
      %16 = arith.mulf %13, %15 : vector<8x32xf32>
      %17 = arith.mulf %16, %16 : vector<8x32xf32>
      %cst_14 = arith.constant dense<0.000000e+00> : vector<8xf32>
      %18 = vector.multi_reduction <add>, %17, %cst_14 [1] : vector<8x32xf32> to vector<8xf32>
      %19 = vector.shape_cast %18 : vector<8xf32> to vector<8x1xf32>
      %cst_15 = arith.constant 1.000000e-16 : f32
      %20 = vector.broadcast %cst_15 : f32 to vector<8x1xf32>
      %21 = arith.maximumf %19, %20 : vector<8x1xf32>
      %22 = math.rsqrt %21 : vector<8x1xf32>
      %23 = vector.broadcast %22 : vector<8x1xf32> to vector<8x32xf32>
      %24 = arith.mulf %16, %23 : vector<8x32xf32>
      %cst_16 = arith.constant dense<0.000000e+00> : vector<8x8xf32>
      %25 = tpu.matmul %24, %24, %cst_16 {dimension_numbers = #tpu.dot_dimension_numbers<[1], [1], [0], [0], [0, 0, 1, 0], [], []>} : vector<8x32xf32>, vector<8x32xf32>, vector<8x8xf32> -> vector<8x8xf32>
      %26 = arith.mulf %24, %24 : vector<8x32xf32>
      %cst_17 = arith.constant dense<0.000000e+00> : vector<8xf32>
      %27 = vector.multi_reduction <add>, %26, %cst_17 [1] : vector<8x32xf32> to vector<8xf32>
      %28 = vector.shape_cast %27 : vector<8xf32> to vector<8x1xf32>
      %29 = math.exp %25 : vector<8x8xf32>
      %cst_18 = arith.constant dense<0.000000e+00> : vector<8xf32>
      %30 = vector.multi_reduction <add>, %29, %cst_18 [1] : vector<8x8xf32> to vector<8xf32>
      %31 = vector.shape_cast %30 : vector<8xf32> to vector<8x1xf32>
      %32 = math.exp %28 : vector<8x1xf32>
      %33 = arith.subf %31, %32 : vector<8x1xf32>
      %34 = math.log %33 : vector<8x1xf32>
      %35 = vector.shape_cast %34 : vector<8x1xf32> to vector<1x8x1xf32>
      %cst_19 = arith.constant dense<0.000000e+00> : vector<1xf32>
      %36 = vector.multi_reduction <add>, %35, %cst_19 [1, 2] : vector<1x8x1xf32> to vector<1xf32>
      %37 = vector.shape_cast %36 : vector<1xf32> to vector<1x1x1xf32>
      %38 = vector.extract %37[0, 0, 0] : f32 from vector<1x1x1xf32>
      %c4_i32 = arith.constant 4 : i32
      %39 = tpu.dynamic_rotate %24 by %c4_i32 dim 0 : vector<8x32xf32>, i32 -> vector<8x32xf32>
      %40 = arith.mulf %24, %39 : vector<8x32xf32>
      %41 = vector.shape_cast %40 : vector<8x32xf32> to vector<1x8x32xf32>
      %cst_20 = arith.constant dense<0.000000e+00> : vector<1xf32>
      %42 = vector.multi_reduction <add>, %41, %cst_20 [1, 2] : vector<1x8x32xf32> to vector<1xf32>
      %43 = vector.shape_cast %42 : vector<1xf32> to vector<1x1x1xf32>
      %44 = vector.extract %43[0, 0, 0] : f32 from vector<1x1x1xf32>
      %45 = arith.subf %38, %44 : f32
      %cst_21 = arith.constant 8.000000e+00 : f32
      %46 = arith.divf %45, %cst_21 : f32
      %c0_22 = arith.constant 0 : index
      %c0_23 = arith.constant 0 : index
      %47 = memref.load %arg4[%c0_22, %c0_23] : memref<1x1xf32, #tpu.memory_space<smem>>
      memref.store %46, %arg4[%c0_22, %c0_23] : memref<1x1xf32, #tpu.memory_space<smem>>
    } else {
    }
    return
  }
  func.func @transform_0(%arg0: i32) -> (i32, i32) {
    %c0_i32 = arith.constant 0 : i32
    %c0_i32_0 = arith.constant 0 : i32
    %c0_i32_1 = arith.constant 0 : i32
    return %c0_i32, %c0_i32_0 : i32, i32
  }
  func.func @transform_1(%arg0: i32) -> (i32, i32) {
    %c0_i32 = arith.constant 0 : i32
    %c0_i32_0 = arith.constant 0 : i32
    return %c0_i32, %arg0 : i32, i32
  }
  func.func @transform_2(%arg0: i32) -> (i32, i32) {
    %c0_i32 = arith.constant 0 : i32
    %c0_i32_0 = arith.constant 0 : i32
    return %arg0, %c0_i32 : i32, i32
  }
  func.func @transform_3(%arg0: i32) -> (i32, i32) {
    %c0_i32 = arith.constant 0 : i32
    %c0_i32_0 = arith.constant 0 : i32
    %c0_i32_1 = arith.constant 0 : i32
    return %c0_i32, %c0_i32_0 : i32, i32
  }
}

</mosaic_0001>

<llo_original>
// kernel: tpu_custom_call.1
$region0: #{tpu_custom_call.1}
  #allocation0 [shape = 'u32[]', space=smem, size = 0x4, offset = 0x4, fixed_abs, tag = 'smem constant byte address 0x4 - core index']
  #allocation1 [shape = 'u32[144,128]{1,0:T(1,128)}', space=vmem, size = 0x12000, scoped, tag = 'internal scratch']
  #allocation2 [shape = 'f32[8,32]{1,0:T(8,128)}', space=vmem, size = 0x1000, scoped, tag = 'scratch operand']
  %s0 = inlined_call_operand.vmem [shape: f32[8,1], index: 0, kind: input, shape index: {}]
  %s1 = inlined_call_operand.vmem [shape: bf16[8,128], index: 1, kind: input, shape index: {}]
  %s2 = inlined_call_operand.vmem [shape: f32[128,32], index: 2, kind: input, shape index: {}]
  %s3 = inlined_call_operand.hbm [shape: f32[1,1], index: 3, kind: output, shape index: {}]
  %s4 = sld [smem:[#allocation0]]
  $region30: #{tpu_custom_call.1} parent=0
    _
  %s6 = ssub.s32 1, %s4
  %s7 = scalar_select 0, %s6, %s4
  $region1: #{tpu_custom_call.1} parent=0
    #allocation3 [shape = 'u8[512]{0}', space=smem, size = 0x200, scoped, tag = 'output window, operand 0, single buffered']
    #allocation4 [shape = 's32[1]{0}', space=sflag, size = 0x4, scoped, tag = 'scoped memory for tpu_custom_call.1']
    %8 = vsyncpa [#allocation4], 0
    // Predicated region
    $region2: #{tpu_custom_call.1} parent=1 // pred_check
      _
    $region3: #{tpu_custom_call.1} parent=1 // pred_check_branch
      %10 = sbr.rel (0) target = $region5
    $region4: #{tpu_custom_call.1} parent=1 // pred_region
      _
    $region5: #{tpu_custom_call.1} parent=1 // pred_fallthru
      _
    // Predicated region
    $region6: #{tpu_custom_call.1} parent=1 // pred_check
      _
    $region7: #{tpu_custom_call.1} parent=1 // pred_check_branch
      %12 = sbr.rel (0) target = $region9
    $region8: #{tpu_custom_call.1} parent=1 // pred_region
      _
    $region9: #{tpu_custom_call.1} parent=1 // pred_fallthru
      _
    // Predicated region
    $region10: #{tpu_custom_call.1} parent=1 // pred_check
      _
    $region11: #{tpu_custom_call.1} parent=1 // pred_check_branch
      %14 = sbr.rel (0) target = $region13
    $region12: #{tpu_custom_call.1} parent=1 // pred_region
      _
    $region13: #{tpu_custom_call.1} parent=1 // pred_fallthru
      _
    %p15 = scmp.eq.s32.totalorder 0, 0
    // Predicated region
    $region14: #{tpu_custom_call.1} parent=1 // pred_check
      %p16 = pneg %p15
    $region15: #{tpu_custom_call.1} parent=1 // pred_check_branch
      %18 = sbr.rel (%p16) target = $region17
    $region16: #{tpu_custom_call.1} parent=1 // pred_region
      %vm19 = vcmask 261120
      %20 = vst.msk [vmem:[#allocation2] sm:$0xff] %vm19, 0.0
    $region17: #{tpu_custom_call.1} parent=1 // pred_fallthru
      _
    %v21 = vld [vmem:[#allocation2] sm:$0xff]
    %v22 = vld [vmem:[%s1] sm:$0xf]
    %v23 = vunpack.c.l.bf16 %v22
    %v24 = vld [vmem:[%s2] sm:$0xff]
    %v25 = vld [vmem:[%s2 + $0x8] sm:$0xff]
    %v26 = vld [vmem:[%s2 + $0x10] sm:$0xff]
    %v27 = vld [vmem:[%s2 + $0x18] sm:$0xff]
    %v28 = vld [vmem:[%s2 + $0x20] sm:$0xff]
    %v29 = vld [vmem:[%s2 + $0x28] sm:$0xff]
    %v30 = vld [vmem:[%s2 + $0x30] sm:$0xff]
    %v31 = vld [vmem:[%s2 + $0x38] sm:$0xff]
    %v32 = vld [vmem:[%s2 + $0x40] sm:$0xff]
    %v33 = vld [vmem:[%s2 + $0x48] sm:$0xff]
    %v34 = vld [vmem:[%s2 + $0x50] sm:$0xff]
    %v35 = vld [vmem:[%s2 + $0x58] sm:$0xff]
    %v36 = vld [vmem:[%s2 + $0x60] sm:$0xff]
    %v37 = vld [vmem:[%s2 + $0x68] sm:$0xff]
    %v38 = vld [vmem:[%s2 + $0x70] sm:$0xff]
    %v39 = vld [vmem:[%s2 + $0x78] sm:$0xff]
    %40 = vmatprep.subr.mxu0 0.0
    %41 = vmatpush1.msra.mxu0 %v39
    %42 = vmatprep.subr.mxu0 0.0
    %43 = vmatpush1.msra.mxu0 %v38
    %44 = vmatprep.subr.mxu0 0.0
    %45 = vmatpush1.msra.mxu0 %v37
    %46 = vmatprep.subr.mxu0 0.0
    %47 = vmatpush1.msra.mxu0 %v36
    %48 = vmatprep.subr.mxu0 0.0
    %49 = vmatpush1.msra.mxu0 %v35
    %50 = vmatprep.subr.mxu0 0.0
    %51 = vmatpush1.msra.mxu0 %v34
    %52 = vmatprep.subr.mxu0 0.0
    %53 = vmatpush1.msra.mxu0 %v33
    %54 = vmatprep.subr.mxu0 0.0
    %55 = vmatpush1.msra.mxu0 %v32
    %56 = vmatprep.subr.mxu0 0.0
    %57 = vmatpush1.msra.mxu0 %v31
    %58 = vmatprep.subr.mxu0 0.0
    %59 = vmatpush1.msra.mxu0 %v30
    %60 = vmatprep.subr.mxu0 0.0
    %61 = vmatpush1.msra.mxu0 %v29
    %62 = vmatprep.subr.mxu0 0.0
    %63 = vmatpush1.msra.mxu0 %v28
    %64 = vmatprep.subr.mxu0 0.0
    %65 = vmatpush1.msra.mxu0 %v27
    %66 = vmatprep.subr.mxu0 0.0
    %67 = vmatpush1.msra.mxu0 %v26
    %68 = vmatprep.subr.mxu0 0.0
    %69 = vmatpush1.msra.mxu0 %v25
    %70 = vmatprep.subr.mxu0 0.0
    %71 = vmatpush1.msra.mxu0 %v24
    %72 = vmatprep.subr.mxu0 0.0
    %73 = vmatpush2.msra.mxu0 0.0
    %74 = vmatprep.subr.mxu0 0.0
    %75 = vmatpush2.msra.mxu0 0.0
    %76 = vmatprep.subr.mxu0 0.0
    %77 = vmatpush2.msra.mxu0 0.0
    %78 = vmatprep.subr.mxu0 0.0
    %79 = vmatpush2.msra.mxu0 0.0
    %80 = vmatprep.subr.mxu0 0.0
    %81 = vmatpush2.msra.mxu0 0.0
    %82 = vmatprep.subr.mxu0 0.0
    %83 = vmatpush2.msra.mxu0 0.0
    %84 = vmatprep.subr.mxu0 0.0
    %85 = vmatpush2.msra.mxu0 0.0
    %86 = vmatprep.subr.mxu0 0.0
    %87 = vmatpush2.msra.mxu0 0.0
    %88 = vmatprep.subr.mxu0 0.0
    %89 = vmatpush2.msra.mxu0 0.0
    %90 = vmatprep.subr.mxu0 0.0
    %91 = vmatpush2.msra.mxu0 0.0
    %92 = vmatprep.subr.mxu0 0.0
    %93 = vmatpush2.msra.mxu0 0.0
    %94 = vmatprep.subr.mxu0 0.0
    %95 = vmatpush2.msra.mxu0 0.0
    %96 = vmatprep.subr.mxu0 0.0
    %97 = vmatpush2.msra.mxu0 0.0
    %98 = vmatprep.subr.mxu0 0.0
    %99 = vmatpush2.msra.mxu0 0.0
    %100 = vmatprep.subr.mxu0 0.0
    %101 = vmatpush2.msra.mxu0 0.0
    %102 = vmatprep.subr.mxu0 0.0
    %103 = vmatpush2.msra.mxu0 0.0
    %104 = vmatprep.mubr.f32.mxu0 0.0
    %105 = vmatmul.mubr.f32.gmra.mxu0 %v23
    %v106 = vpop.f32.mrf.mxu0
    %v107 = vadd.f32 0.0, %v106
    %v108 = vpop.f32.mrf.mxu0
    %109 = vdwg.mxu0
    %v110 = vadd.f32 %v21, %v107
    %vm111 = vcmask 261120
    %112 = vst.msk [vmem:[#allocation2] sm:$0xff] %vm111, %v110
    // Predicated region
    $region18: #{tpu_custom_call.1} parent=1 // pred_check
      %p113 = pneg %p15
    $region19: #{tpu_custom_call.1} parent=1 // pred_check_branch
      %115 = sbr.rel (%p113) target = $region21
    $region20: #{tpu_custom_call.1} parent=1 // pred_region
      %v116 = vld [vmem:[#allocation2] sm:$0xff]
      %v117 = vld [vmem:[%s0] sm:$0xff]
      %119 = vset.pattern.permute.xlu0 0
      %120 = vperm.xlu0 %119, %v117
      %v121 = vpop.permute.xlu0 %120
      %v123 = vmul.f32 %v116, %v121
      %v124 = vmul.f32 %v123, %v123
      %v125 = vsel %vm111, %v124, 0.0
      %126 = vadd.xlane.f32.xlu0 %v125
      %v127 = vpop.xlane.xlu0 %126
      %v128 = vmax.f32 %v127, 1e-16
      %v129 = vrsqrt.pop %v128
      %v130 = vmul.f32 %v123, %v129
      %v132 = vsel %vm111, %v130, 0
      %134 = vmatprep.subr.mxu0 0.0
      %135 = vmatpush1.xpose.msra.mxu0 0.0
      %136 = vmatprep.subr.mxu0 0.0
      %137 = vmatpush1.xpose.msra.mxu0 0.0
      %138 = vmatprep.subr.mxu0 0.0
      %139 = vmatpush1.xpose.msra.mxu0 0.0
      %140 = vmatprep.subr.mxu0 0.0
      %141 = vmatpush1.xpose.msra.mxu0 0.0
      %142 = vmatprep.subr.mxu0 0.0
      %143 = vmatpush1.xpose.msra.mxu0 0.0
      %144 = vmatprep.subr.mxu0 0.0
      %145 = vmatpush1.xpose.msra.mxu0 0.0
      %146 = vmatprep.subr.mxu0 0.0
      %147 = vmatpush1.xpose.msra.mxu0 0.0
      %148 = vmatprep.subr.mxu0 0.0
      %149 = vmatpush1.xpose.msra.mxu0 0.0
      %150 = vmatprep.subr.mxu0 0.0
      %151 = vmatpush1.xpose.msra.mxu0 0.0
      %152 = vmatprep.subr.mxu0 0.0
      %153 = vmatpush1.xpose.msra.mxu0 0.0
      %154 = vmatprep.subr.mxu0 0.0
      %155 = vmatpush1.xpose.msra.mxu0 0.0
      %156 = vmatprep.subr.mxu0 0.0
      %157 = vmatpush1.xpose.msra.mxu0 0.0
      %158 = vmatprep.subr.mxu0 0.0
      %159 = vmatpush1.xpose.msra.mxu0 0.0
      %160 = vmatprep.subr.mxu0 0.0
      %161 = vmatpush1.xpose.msra.mxu0 0.0
      %162 = vmatprep.subr.mxu0 0.0
      %163 = vmatpush1.xpose.msra.mxu0 0.0
      %164 = vmatprep.subr.mxu0 0.0
      %165 = vmatpush1.xpose.msra.mxu0 %v132
      %166 = vmatprep.subr.mxu0 0.0
      %167 = vmatpush2.xpose.msra.mxu0 0.0
      %168 = vmatprep.subr.mxu0 0.0
      %169 = vmatpush2.xpose.msra.mxu0 0.0
      %170 = vmatprep.subr.mxu0 0.0
      %171 = vmatpush2.xpose.msra.mxu0 0.0
      %172 = vmatprep.subr.mxu0 0.0
      %173 = vmatpush2.xpose.msra.mxu0 0.0
      %174 = vmatprep.subr.mxu0 0.0
      %175 = vmatpush2.xpose.msra.mxu0 0.0
      %176 = vmatprep.subr.mxu0 0.0
      %177 = vmatpush2.xpose.msra.mxu0 0.0
      %178 = vmatprep.subr.mxu0 0.0
      %179 = vmatpush2.xpose.msra.mxu0 0.0
      %180 = vmatprep.subr.mxu0 0.0
      %181 = vmatpush2.xpose.msra.mxu0 0.0
      %182 = vmatprep.subr.mxu0 0.0
      %183 = vmatpush2.xpose.msra.mxu0 0.0
      %184 = vmatprep.subr.mxu0 0.0
      %185 = vmatpush2.xpose.msra.mxu0 0.0
      %186 = vmatprep.subr.mxu0 0.0
      %187 = vmatpush2.xpose.msra.mxu0 0.0
      %188 = vmatprep.subr.mxu0 0.0
      %189 = vmatpush2.xpose.msra.mxu0 0.0
      %190 = vmatprep.subr.mxu0 0.0
      %191 = vmatpush2.xpose.msra.mxu0 0.0
      %192 = vmatprep.subr.mxu0 0.0
      %193 = vmatpush2.xpose.msra.mxu0 0.0
      %194 = vmatprep.subr.mxu0 0.0
      %195 = vmatpush2.xpose.msra.mxu0 0.0
      %196 = vmatprep.subr.mxu0 0.0
      %197 = vmatpush2.xpose.msra.mxu0 0.0
      %198 = vmatprep.mubr.f32.mxu0 0.0
      %199 = vmatmul.mubr.f32.gmra.mxu0 %v132
      %v200 = vpop.f32.mrf.mxu0
      %v201 = vadd.f32 0.0, %v200
      %v202 = vpop.f32.mrf.mxu0
      %203 = vdwg.mxu0
      %v204 = vmul.f32 %v130, %v130
      %v205 = vsel %vm111, %v204, 0.0
      %206 = vadd.xlane.f32.xlu0 %v205
      %v207 = vpop.xlane.xlu0 %206
      %v208 = vmul.f32 %v201, 1.442695
      %v209 = vpow.pop %v208
      %vm210 = vcmask 64512
      %v211 = vsel %vm210, %v209, 0.0
      %212 = vadd.xlane.f32.xlu0 %v211
      %v213 = vpop.xlane.xlu0 %212
      %v214 = vmul.f32 %v207, 1.442695
      %v215 = vpow.pop %v214
      %v216 = vsub.f32 %v213, %v215
      %v217 = vlog2.pop %v216
      %v218 = vmul.f32 %v217, 0.6931472
      %vm219 = vcmask 7168
      %v220 = vsel %vm219, %v218, 0.0
      %221 = vadd.xlane.f32.xlu0 %v220
      %v222 = vpop.xlane.xlu0 %221
      %v223 = vrot.slane %v222, 4
      %v224 = vadd.f32 %v222, %v223
      %v225 = vrot.slane %v224, 2
      %v226 = vadd.f32 %v224, %v225
      %v227 = vrot.slane %v226, 1
      %v228 = vadd.f32 %v226, %v227
      %s229 = vtos %v228
      %v230 = vrot.slane %v130, 4
      %v231 = vmul.f32 %v130, %v230
      %v232 = vsel %vm111, %v231, 0.0
      %233 = vadd.xlane.f32.xlu0 %v232
      %v234 = vpop.xlane.xlu0 %233
      %v235 = vrot.slane %v234, 4
      %v236 = vadd.f32 %v234, %v235
      %v237 = vrot.slane %v236, 2
      %v238 = vadd.f32 %v236, %v237
      %v239 = vrot.slane %v238, 1
      %v240 = vadd.f32 %v238, %v239
      %s241 = vtos %v240
      %s242 = ssub.f32 %s229, %s241
      %v243 = vrcp.pop 8.0
      %s244 = vtos %v243
      %s245 = smul.f32 %s242, %s244
      %s246 = scalar_lea.smem [#allocation3], 0
      %247 = sst [smem:[%s246]] %s245
    $region21: #{tpu_custom_call.1} parent=1 // pred_fallthru
      _
    // Predicated region
    $region22: #{tpu_custom_call.1} parent=1 // pred_check
      _
    $region23: #{tpu_custom_call.1} parent=1 // pred_check_branch
      %249 = sbr.rel (0) target = $region25
    $region24: #{tpu_custom_call.1} parent=1 // pred_region
      %s251 = ssub.s32 16, 16
      %252 = vsyncadd [#allocation4], %s251
      %255 = dma.smem_to_hbm [#allocation3], 16, %s3, [#allocation4]
    $region25: #{tpu_custom_call.1} parent=1 // pred_fallthru
      _
    // Predicated region
    $region26: #{tpu_custom_call.1} parent=1 // pred_check
      _
    $region27: #{tpu_custom_call.1} parent=1 // pred_check_branch
      %257 = sbr.rel (0) target = $region29
    $region28: #{tpu_custom_call.1} parent=1 // pred_region
      %258 = dma.done [#allocation4], 16
    $region29: #{tpu_custom_call.1} parent=1 // pred_fallthru
      _
    %259 = sfence
    %260 = vsyncpa [#allocation4], 1

</llo_original>
